<compile_context>
chip_gen: v7x
topology: tpu7x:2x2x1
jax: 0.10.0
libtpu: 0.0.40
codegen_flags: <defaults>
</compile_context>

<pallas_src>
import functools

import jax
import jax.numpy as jnp
from jax import lax
from jax.experimental import pallas as pl
from jax.experimental.pallas import tpu as pltpu


def _resnet_block_kernel(x_ref, w_ref, b_ref, o_ref, slab_ref, *, width):
    """residual + conv_1(leaky_relu(x)) for a tile of bb images.

    x_ref    : (R, HW)        R = bb*C rows (image-major, channel-minor), HW lanes
    w_ref    : (R, 9*R)       block-diagonal conv_1 weights (see wrapper)
    b_ref    : (R, 1)         conv_1 bias replicated per image
    o_ref    : (R, HW)        output tile
    slab_ref : (9*R, HW)      VMEM scratch: im2col slab, tap-major rows
    """
    R, HW = x_ref.shape
    W = width

    x = x_ref[...]                         # dense full-vreg load of the tile
    act = jnp.maximum(x, 0.2 * x)          # LeakyReLU(0.2) on the whole tile

    # Column-validity masks for the horizontal taps (kw != 1).  Vertical
    # (kh) out-of-range taps are handled by the zero-fill of the lane shift:
    # each row of the tile is one (image, channel) plane, so a flat shift of
    # s = (kh-1)*W + (kw-1) never leaks across images/channels.
    ww = lax.broadcasted_iota(jnp.int32, (1, HW), 1) % W
    ok_left = ww != 0                      # source column w-1 exists (kw == 0)
    ok_right = ww != (W - 1)               # source column w+1 exists (kw == 2)

    # Build the im2col slab: 9 shifted/masked copies of the whole activation
    # tile, each stored as a dense (R, HW) full-vreg store (R % 8 == 0).
    for kh in range(3):
        for kw in range(3):
            t = kh * 3 + kw
            s = (kh - 1) * W + (kw - 1)
            if s > 0:
                tap = jnp.concatenate(
                    [act[:, s:], jnp.zeros((R, s), act.dtype)], axis=1)
            elif s < 0:
                tap = jnp.concatenate(
                    [jnp.zeros((R, -s), act.dtype), act[:, :HW + s]], axis=1)
            else:
                tap = act
            if kw == 0:
                tap = jnp.where(ok_left, tap, 0.0)
            elif kw == 2:
                tap = jnp.where(ok_right, tap, 0.0)
            slab_ref[t * R:(t + 1) * R, :] = tap

    # Single fused MXU contraction per grid step: (R, 9R) @ (9R, HW) -> (R, HW),
    # produced directly in the dense residual layout.
    conv = jnp.dot(w_ref[...], slab_ref[...],
                   preferred_element_type=jnp.float32)

    # Residual add + bias (one broadcast per step, not per image), f32.
    o_ref[...] = (x + conv + b_ref[...]).astype(o_ref.dtype)


def _pick_bb(B, C, HW):
    """Images per grid step: divisor of B, dense sublane tiles, VMEM-checked,
    capped at 32 (block-diag FLOP inflation), prefer an even grid for v7x."""
    divisors = [d for d in range(1, B + 1) if B % d == 0]
    valid = [d for d in divisors if (d * C) % 8 == 0] or [B]

    def fits_vmem(d):
        R = d * C
        # double-buffered in/out tiles + slab scratch + block-diag weights + temps
        est = 4 * (4 * R * HW + 9 * R * HW + 9 * R * R + 2 * R * HW)
        return est <= 24 * 1024 * 1024     # sized for v7x's 32 MiB scoped VMEM

    valid = [d for d in valid if fits_vmem(d)] or [min(valid)]
    capped = [d for d in valid if d <= 32] or [min(valid)]
    # Prefer an even grid length >= 2 so v7x can shard across its 2 TensorCores.
    preferred = [d for d in capped if (B // d) >= 2 and (B // d) % 2 == 0]
    return max(preferred or capped)


@jax.jit
def resnet_block_forward(x_nchw, w1_hwio, b1):
    """x_nchw: [B, C, H, W] float32 (PyTorch layout).  Returns [B, C, H, W]."""
    B, C, H, W = x_nchw.shape
    kh, kw, cin, cout = w1_hwio.shape
    assert (kh, kw) == (3, 3) and cin == C and cout == C, (
        "requires inplanes == planes (identity residual)")
    HW = H * W

    bb = _pick_bb(B, C, HW)
    R = bb * C

    # Free contiguous reshape: NCHW consumed as (B*C, HW); no HBM transpose.
    x_flat = x_nchw.reshape(B * C, HW)

    # Block-diagonal weights: row (b*C + co), col (t*R + b*C + ci) holds
    # w1[kh, kw, ci, co] with t = kh*3 + kw (same image b), else 0.  Tiny
    # (<= 576 KiB at bb=32) and built once outside the kernel.
    w_tap = jnp.transpose(w1_hwio, (3, 0, 1, 2)).reshape(C, 9, C)   # [co, t, ci]
    eye = jnp.eye(bb, dtype=w_tap.dtype)
    wbd = (eye[:, None, None, :, None] *
           w_tap[None, :, :, None, :]).reshape(R, 9 * R)
    bcol = jnp.tile(b1, (bb,)).reshape(R, 1)

    out_flat = pl.pallas_call(
        functools.partial(_resnet_block_kernel, width=W),
        out_shape=jax.ShapeDtypeStruct((B * C, HW), x_nchw.dtype),
        grid_spec=pltpu.PrefetchScalarGridSpec(
            num_scalar_prefetch=0,
            grid=(B // bb,),
            in_specs=[
                pl.BlockSpec((R, HW), lambda i: (i, 0)),
                pl.BlockSpec((R, 9 * R), lambda i: (0, 0)),
                pl.BlockSpec((R, 1), lambda i: (0, 0)),
            ],
            out_specs=pl.BlockSpec((R, HW), lambda i: (i, 0)),
            scratch_shapes=[
                pltpu.VMEM((9 * R, HW), jnp.float32),
            ],
        ),
        compiler_params=pltpu.CompilerParams(
            dimension_semantics=("parallel",)),
    )(x_flat, wbd, bcol)

    return out_flat.reshape(B, C, H, W)


def _reference(x_nchw, w1_hwio, b1):
    """Pure-JAX reference of the (effective) forward, for a sanity check."""
    a = jnp.maximum(x_nchw, 0.2 * x_nchw)
    conv = lax.conv_general_dilated(
        a, w1_hwio, window_strides=(1, 1), padding="SAME",
        dimension_numbers=("NCHW", "HWIO", "NCHW"),
    ) + b1.reshape(1, -1, 1, 1)
    return x_nchw + conv


if __name__ == "__main__":
    inplanes = planes = 4
    B, H, W = 2, 16, 16

    key = jax.random.PRNGKey(0)
    kx, kw0, kb0, kw1, kb1 = jax.random.split(key, 5)

    x = jax.random.normal(kx, (B, inplanes, H, W), dtype=jnp.float32)

    # Deterministic PyTorch-Conv2d-style init (uniform +/- 1/sqrt(fan_in)).
    fan_in = inplanes * 3 * 3
    bound = 1.0 / jnp.sqrt(jnp.float32(fan_in))
    # conv_0 parameters exist in the module but are dead code in forward().
    _w0 = jax.random.uniform(kw0, (3, 3, inplanes, planes), jnp.float32, -bound, bound)
    _b0 = jax.random.uniform(kb0, (planes,), jnp.float32, -bound, bound)
    w1 = jax.random.uniform(kw1, (3, 3, planes, planes), jnp.float32, -bound, bound)
    b1 = jax.random.uniform(kb1, (planes,), jnp.float32, -bound, bound)

    out = resnet_block_forward(x, w1, b1)
    out = jax.block_until_ready(out)

    ref = jax.block_until_ready(_reference(x, w1, b1))
    assert out.shape == (B, planes, H, W)
    assert jnp.allclose(out, ref, atol=1e-4, rtol=1e-4), "mismatch vs JAX reference"

    print("KERNEL_OK")
</pallas_src>

<mosaic_0001>
module attributes {stable_mosaic.version = 11 : i64} {
  func.func @_resnet_block_kernel(%arg0: i32, %arg1: memref<8x256xf32, #tpu.memory_space<vmem>>, %arg2: memref<8x72xf32, #tpu.memory_space<vmem>>, %arg3: memref<8x1xf32, #tpu.memory_space<vmem>>, %arg4: memref<8x256xf32, #tpu.memory_space<vmem>>, %arg5: memref<72x256xf32, #tpu.memory_space<vmem>>) attributes {dimension_semantics = [#tpu.dimension_semantics<parallel>], iteration_bounds = array<i64: 1>, scalar_prefetch = 0 : i64, scratch_operands = 1 : i64, tpu.core_type = #tpu.core_type<tc>, window_params = [{transform_indices = @transform_0, window_bounds = array<i64: 8, 256>}, {pipeline_mode = #tpu.pipeline_mode<synchronous>, transform_indices = @transform_1, window_bounds = array<i64: 8, 72>}, {pipeline_mode = #tpu.pipeline_mode<synchronous>, transform_indices = @transform_2, window_bounds = array<i64: 8, 1>}, {transform_indices = @transform_3, window_bounds = array<i64: 8, 256>}]} {
    %c0 = arith.constant 0 : index
    %c0_0 = arith.constant 0 : index
    %0 = vector.load %arg1[%c0, %c0_0] : memref<8x256xf32, #tpu.memory_space<vmem>>, vector<8x256xf32>
    %cst = arith.constant 2.000000e-01 : f32
    %1 = vector.broadcast %cst : f32 to vector<8x256xf32>
    %2 = arith.mulf %1, %0 : vector<8x256xf32>
    %3 = arith.maximumf %0, %2 : vector<8x256xf32>
    %4 = tpu.iota {dimensions = array<i32: 1>} : vector<1x256xi32>
    %c16_i32 = arith.constant 16 : i32
    %c0_i32 = arith.constant 0 : i32
    %5 = arith.cmpi eq, %c16_i32, %c0_i32 : i32
    %c1_i32 = arith.constant 1 : i32
    %6 = arith.select %5, %c1_i32, %c16_i32 : i32
    %7 = vector.broadcast %6 : i32 to vector<1x256xi32>
    %8 = arith.remsi %4, %7 : vector<1x256xi32>
    %c0_i32_1 = arith.constant 0 : i32
    %9 = vector.broadcast %c0_i32_1 : i32 to vector<1x256xi32>
    %10 = arith.cmpi ne, %8, %9 : vector<1x256xi32>
    %c0_i32_2 = arith.constant 0 : i32
    %11 = vector.broadcast %c0_i32_2 : i32 to vector<1x256xi32>
    %12 = arith.cmpi slt, %8, %11 : vector<1x256xi32>
    %c0_i32_3 = arith.constant 0 : i32
    %13 = arith.cmpi slt, %6, %c0_i32_3 : i32
    %14 = vector.broadcast %13 : i1 to vector<1x256xi1>
    %15 = vector.broadcast %14 : vector<1x256xi1> to vector<1x256xi1>
    %16 = arith.xori %12, %15 : vector<1x256xi1>
    %17 = arith.andi %16, %10 : vector<1x256xi1>
    %18 = vector.broadcast %6 : i32 to vector<1x256xi32>
    %19 = arith.addi %8, %18 : vector<1x256xi32>
    %20 = arith.select %17, %19, %8 : vector<1x256xi1>, vector<1x256xi32>
    %c0_i32_4 = arith.constant 0 : i32
    %21 = vector.broadcast %c0_i32_4 : i32 to vector<1x256xi32>
    %22 = arith.cmpi ne, %20, %21 : vector<1x256xi32>
    %c15_i32 = arith.constant 15 : i32
    %23 = vector.broadcast %c15_i32 : i32 to vector<1x256xi32>
    %24 = arith.cmpi ne, %20, %23 : vector<1x256xi32>
    %cst_5 = arith.constant 0.000000e+00 : f32
    %25 = vector.broadcast %cst_5 : f32 to vector<8x17xf32>
    %26 = vector.extract_strided_slice %3 {offsets = [0, 0], sizes = [8, 239], strides = [1, 1]} : vector<8x256xf32> to vector<8x239xf32>
    %27 = tpu.concatenate %25, %26 in 1 : vector<8x17xf32>, vector<8x239xf32> -> vector<8x256xf32>
    %cst_6 = arith.constant 0.000000e+00 : f32
    %28 = vector.shape_cast %22 : vector<1x256xi1> to vector<1x256xi1>
    %29 = vector.broadcast %28 : vector<1x256xi1> to vector<8x256xi1>
    %30 = vector.broadcast %cst_6 : f32 to vector<8x256xf32>
    %31 = arith.select %29, %27, %30 : vector<8x256xi1>, vector<8x256xf32>
    %c0_7 = arith.constant 0 : index
    %c0_8 = arith.constant 0 : index
    %32 = vector.load %arg5[%c0_7, %c0_8] : memref<72x256xf32, #tpu.memory_space<vmem>>, vector<8x256xf32>
    tpu.vector_store %arg5[%c0_7, %c0_8], %31 {strides = array<i32>} : memref<72x256xf32, #tpu.memory_space<vmem>>, vector<8x256xf32>,
    %cst_9 = arith.constant 0.000000e+00 : f32
    %33 = vector.broadcast %cst_9 : f32 to vector<8x16xf32>
    %34 = vector.extract_strided_slice %3 {offsets = [0, 0], sizes = [8, 240], strides = [1, 1]} : vector<8x256xf32> to vector<8x240xf32>
    %35 = tpu.concatenate %33, %34 in 1 : vector<8x16xf32>, vector<8x240xf32> -> vector<8x256xf32>
    %c8 = arith.constant 8 : index
    %c0_10 = arith.constant 0 : index
    %36 = vector.load %arg5[%c8, %c0_10] : memref<72x256xf32, #tpu.memory_space<vmem>>, vector<8x256xf32>
    tpu.vector_store %arg5[%c8, %c0_10], %35 {strides = array<i32>} : memref<72x256xf32, #tpu.memory_space<vmem>>, vector<8x256xf32>,
    %cst_11 = arith.constant 0.000000e+00 : f32
    %37 = vector.broadcast %cst_11 : f32 to vector<8x15xf32>
    %38 = vector.extract_strided_slice %3 {offsets = [0, 0], sizes = [8, 241], strides = [1, 1]} : vector<8x256xf32> to vector<8x241xf32>
    %39 = tpu.concatenate %37, %38 in 1 : vector<8x15xf32>, vector<8x241xf32> -> vector<8x256xf32>
    %cst_12 = arith.constant 0.000000e+00 : f32
    %40 = vector.shape_cast %24 : vector<1x256xi1> to vector<1x256xi1>
    %41 = vector.broadcast %40 : vector<1x256xi1> to vector<8x256xi1>
    %42 = vector.broadcast %cst_12 : f32 to vector<8x256xf32>
    %43 = arith.select %41, %39, %42 : vector<8x256xi1>, vector<8x256xf32>
    %c16 = arith.constant 16 : index
    %c0_13 = arith.constant 0 : index
    %44 = vector.load %arg5[%c16, %c0_13] : memref<72x256xf32, #tpu.memory_space<vmem>>, vector<8x256xf32>
    tpu.vector_store %arg5[%c16, %c0_13], %43 {strides = array<i32>} : memref<72x256xf32, #tpu.memory_space<vmem>>, vector<8x256xf32>,
    %cst_14 = arith.constant 0.000000e+00 : f32
    %45 = vector.broadcast %cst_14 : f32 to vector<8x1xf32>
    %46 = vector.extract_strided_slice %3 {offsets = [0, 0], sizes = [8, 255], strides = [1, 1]} : vector<8x256xf32> to vector<8x255xf32>
    %47 = tpu.concatenate %45, %46 in 1 : vector<8x1xf32>, vector<8x255xf32> -> vector<8x256xf32>
    %cst_15 = arith.constant 0.000000e+00 : f32
    %48 = vector.shape_cast %22 : vector<1x256xi1> to vector<1x256xi1>
    %49 = vector.broadcast %48 : vector<1x256xi1> to vector<8x256xi1>
    %50 = vector.broadcast %cst_15 : f32 to vector<8x256xf32>
    %51 = arith.select %49, %47, %50 : vector<8x256xi1>, vector<8x256xf32>
    %c24 = arith.constant 24 : index
    %c0_16 = arith.constant 0 : index
    %52 = vector.load %arg5[%c24, %c0_16] : memref<72x256xf32, #tpu.memory_space<vmem>>, vector<8x256xf32>
    tpu.vector_store %arg5[%c24, %c0_16], %51 {strides = array<i32>} : memref<72x256xf32, #tpu.memory_space<vmem>>, vector<8x256xf32>,
    %c32 = arith.constant 32 : index
    %c0_17 = arith.constant 0 : index
    %53 = vector.load %arg5[%c32, %c0_17] : memref<72x256xf32, #tpu.memory_space<vmem>>, vector<8x256xf32>
    tpu.vector_store %arg5[%c32, %c0_17], %3 {strides = array<i32>} : memref<72x256xf32, #tpu.memory_space<vmem>>, vector<8x256xf32>,
    %54 = vector.extract_strided_slice %3 {offsets = [0, 1], sizes = [8, 255], strides = [1, 1]} : vector<8x256xf32> to vector<8x255xf32>
    %cst_18 = arith.constant 0.000000e+00 : f32
    %55 = vector.broadcast %cst_18 : f32 to vector<8x1xf32>
    %56 = tpu.concatenate %54, %55 in 1 : vector<8x255xf32>, vector<8x1xf32> -> vector<8x256xf32>
    %cst_19 = arith.constant 0.000000e+00 : f32
    %57 = vector.shape_cast %24 : vector<1x256xi1> to vector<1x256xi1>
    %58 = vector.broadcast %57 : vector<1x256xi1> to vector<8x256xi1>
    %59 = vector.broadcast %cst_19 : f32 to vector<8x256xf32>
    %60 = arith.select %58, %56, %59 : vector<8x256xi1>, vector<8x256xf32>
    %c40 = arith.constant 40 : index
    %c0_20 = arith.constant 0 : index
    %61 = vector.load %arg5[%c40, %c0_20] : memref<72x256xf32, #tpu.memory_space<vmem>>, vector<8x256xf32>
    tpu.vector_store %arg5[%c40, %c0_20], %60 {strides = array<i32>} : memref<72x256xf32, #tpu.memory_space<vmem>>, vector<8x256xf32>,
    %62 = vector.extract_strided_slice %3 {offsets = [0, 15], sizes = [8, 241], strides = [1, 1]} : vector<8x256xf32> to vector<8x241xf32>
    %cst_21 = arith.constant 0.000000e+00 : f32
    %63 = vector.broadcast %cst_21 : f32 to vector<8x15xf32>
    %64 = tpu.concatenate %62, %63 in 1 : vector<8x241xf32>, vector<8x15xf32> -> vector<8x256xf32>
    %cst_22 = arith.constant 0.000000e+00 : f32
    %65 = vector.shape_cast %22 : vector<1x256xi1> to vector<1x256xi1>
    %66 = vector.broadcast %65 : vector<1x256xi1> to vector<8x256xi1>
    %67 = vector.broadcast %cst_22 : f32 to vector<8x256xf32>
    %68 = arith.select %66, %64, %67 : vector<8x256xi1>, vector<8x256xf32>
    %c48 = arith.constant 48 : index
    %c0_23 = arith.constant 0 : index
    %69 = vector.load %arg5[%c48, %c0_23] : memref<72x256xf32, #tpu.memory_space<vmem>>, vector<8x256xf32>
    tpu.vector_store %arg5[%c48, %c0_23], %68 {strides = array<i32>} : memref<72x256xf32, #tpu.memory_space<vmem>>, vector<8x256xf32>,
    %70 = vector.extract_strided_slice %3 {offsets = [0, 16], sizes = [8, 240], strides = [1, 1]} : vector<8x256xf32> to vector<8x240xf32>
    %cst_24 = arith.constant 0.000000e+00 : f32
    %71 = vector.broadcast %cst_24 : f32 to vector<8x16xf32>
    %72 = tpu.concatenate %70, %71 in 1 : vector<8x240xf32>, vector<8x16xf32> -> vector<8x256xf32>
    %c56 = arith.constant 56 : index
    %c0_25 = arith.constant 0 : index
    %73 = vector.load %arg5[%c56, %c0_25] : memref<72x256xf32, #tpu.memory_space<vmem>>, vector<8x256xf32>
    tpu.vector_store %arg5[%c56, %c0_25], %72 {strides = array<i32>} : memref<72x256xf32, #tpu.memory_space<vmem>>, vector<8x256xf32>,
    %74 = vector.extract_strided_slice %3 {offsets = [0, 17], sizes = [8, 239], strides = [1, 1]} : vector<8x256xf32> to vector<8x239xf32>
    %cst_26 = arith.constant 0.000000e+00 : f32
    %75 = vector.broadcast %cst_26 : f32 to vector<8x17xf32>
    %76 = tpu.concatenate %74, %75 in 1 : vector<8x239xf32>, vector<8x17xf32> -> vector<8x256xf32>
    %cst_27 = arith.constant 0.000000e+00 : f32
    %77 = vector.shape_cast %24 : vector<1x256xi1> to vector<1x256xi1>
    %78 = vector.broadcast %77 : vector<1x256xi1> to vector<8x256xi1>
    %79 = vector.broadcast %cst_27 : f32 to vector<8x256xf32>
    %80 = arith.select %78, %76, %79 : vector<8x256xi1>, vector<8x256xf32>
    %c64 = arith.constant 64 : index
    %c0_28 = arith.constant 0 : index
    %81 = vector.load %arg5[%c64, %c0_28] : memref<72x256xf32, #tpu.memory_space<vmem>>, vector<8x256xf32>
    tpu.vector_store %arg5[%c64, %c0_28], %80 {strides = array<i32>} : memref<72x256xf32, #tpu.memory_space<vmem>>, vector<8x256xf32>,
    %c0_29 = arith.constant 0 : index
    %c0_30 = arith.constant 0 : index
    %82 = vector.load %arg2[%c0_29, %c0_30] : memref<8x72xf32, #tpu.memory_space<vmem>>, vector<8x72xf32>
    %c0_31 = arith.constant 0 : index
    %c0_32 = arith.constant 0 : index
    %83 = vector.load %arg5[%c0_31, %c0_32] : memref<72x256xf32, #tpu.memory_space<vmem>>, vector<72x256xf32>
    %cst_33 = arith.constant dense<0.000000e+00> : vector<8x256xf32>
    %84 = tpu.matmul %82, %83, %cst_33 {dimension_numbers = #tpu.dot_dimension_numbers<[1], [0], [0], [1], [0, 0, 1, 1], [], []>} : vector<8x72xf32>, vector<72x256xf32>, vector<8x256xf32> -> vector<8x256xf32>
    %85 = arith.addf %0, %84 : vector<8x256xf32>
    %c0_34 = arith.constant 0 : index
    %c0_35 = arith.constant 0 : index
    %86 = vector.load %arg3[%c0_34, %c0_35] : memref<8x1xf32, #tpu.memory_space<vmem>>, vector<8x1xf32>
    %87 = vector.broadcast %86 : vector<8x1xf32> to vector<8x256xf32>
    %88 = arith.addf %85, %87 : vector<8x256xf32>
    %c0_36 = arith.constant 0 : index
    %c0_37 = arith.constant 0 : index
    %89 = vector.load %arg4[%c0_36, %c0_37] : memref<8x256xf32, #tpu.memory_space<vmem>>, vector<8x256xf32>
    tpu.vector_store %arg4[%c0_36, %c0_37], %88 {strides = array<i32>} : memref<8x256xf32, #tpu.memory_space<vmem>>, vector<8x256xf32>,
    return
  }
  func.func @transform_0(%arg0: i32) -> (i32, i32) {
    %c0_i32 = arith.constant 0 : i32
    %c0_i32_0 = arith.constant 0 : i32
    return %arg0, %c0_i32 : i32, i32
  }
  func.func @transform_1(%arg0: i32) -> (i32, i32) {
    %c0_i32 = arith.constant 0 : i32
    %c0_i32_0 = arith.constant 0 : i32
    %c0_i32_1 = arith.constant 0 : i32
    return %c0_i32, %c0_i32_0 : i32, i32
  }
  func.func @transform_2(%arg0: i32) -> (i32, i32) {
    %c0_i32 = arith.constant 0 : i32
    %c0_i32_0 = arith.constant 0 : i32
    %c0_i32_1 = arith.constant 0 : i32
    return %c0_i32, %c0_i32_0 : i32, i32
  }
  func.func @transform_3(%arg0: i32) -> (i32, i32) {
    %c0_i32 = arith.constant 0 : i32
    %c0_i32_0 = arith.constant 0 : i32
    return %arg0, %c0_i32 : i32, i32
  }
}

</mosaic_0001>

<llo_original>
// kernel: tile.8
$region0: #{tile.8}
  #allocation0 [shape = 's32[1]{0}', space=sflag, size = 0x4, scoped, tag = 'scoped memory for tile.8']
  %s0 = inlined_call_operand.vmem [shape: f32[4], index: 0, kind: input, shape index: {}]
  %s1 = inlined_call_operand.vmem [shape: f32[2,4], index: 1, kind: output, shape index: {}]
  // Predicated region
  $region2: #{tile.8} parent=0 // pred_check
    _
  $region3: #{tile.8} parent=0 // pred_check_branch
    %3 = sbr.rel (0) target = $region5
  $region4: #{tile.8} parent=0 // pred_region
    _
  $region5: #{tile.8} parent=0 // pred_fallthru
    _
  %v4 = vld [vmem:[%s0] ss:$0 sm:$0xff]
  %5 = vst [vmem:[%s1] sm:$0x3] %v4

// kernel: tile.0
$region0: #{tile.0}
  %s0 = inlined_call_operand.vmem [shape: f32[2,4], index: 0, kind: input, shape index: {}]
  %s1 = inlined_call_operand.vmem [shape: f32[8,1], index: 1, kind: output, shape index: {}]
  $region1: #{tile.0} parent=0
    #allocation0 [shape = 'u8[4096]{0}', space=vmem, size = 0x1000, scoped, tag = 'scoped mem for input reshape']
    %s3 = sshllo.u32 0, 2
    %v4 = vld [vmem:[%s0] sm:%s3]
    %5 = vst [vmem:[#allocation0] sm:%s3] %v4
    %v6 = vld [vmem:[#allocation0] sm:$0x3]
    %vm7 = vcmask 7168
    %8 = vst.msk [vmem:[%s1] ss:$4 sm:$0x3] %vm7, %v6
    %v9 = vld [vmem:[#allocation0] sm:$0x3]
    %10 = vrot.lane.b32.xlu0 %v9, 127
    %v11 = vpop.permute.xlu0 %10
    %vm12 = vcmask 7168
    %s13 = scalar_lea.vmem %s1, 1
    %14 = vst.msk [vmem:[%s13] ss:$4 sm:$0x3] %vm12, %v11
    %v15 = vld [vmem:[#allocation0] sm:$0x3]
    %16 = vrot.lane.b32.xlu0 %v15, 126
    %v17 = vpop.permute.xlu0 %16
    %vm18 = vcmask 7168
    %s19 = scalar_lea.vmem %s1, 2
    %20 = vst.msk [vmem:[%s19] ss:$4 sm:$0x3] %vm18, %v17
    %v21 = vld [vmem:[#allocation0] sm:$0x3]
    %22 = vrot.lane.b32.xlu0 %v21, 125
    %v23 = vpop.permute.xlu0 %22
    %vm24 = vcmask 7168
    %s25 = scalar_lea.vmem %s1, 3
    %26 = vst.msk [vmem:[%s25] ss:$4 sm:$0x3] %vm24, %v23

// kernel: resnet_block_forward.1
$region0: #{resnet_block_forward.1}
  #allocation0 [shape = 'u32[]', space=smem, size = 0x4, offset = 0x4, fixed_abs, tag = 'smem constant byte address 0x4 - core index']
  #allocation1 [shape = 'u32[144,128]{1,0:T(1,128)}', space=vmem, size = 0x12000, scoped, tag = 'internal scratch']
  #allocation2 [shape = 'f32[72,256]{1,0:T(8,128)}', space=vmem, size = 0x12000, scoped, tag = 'scratch operand']
  %s0 = inlined_call_operand.vmem [shape: f32[8,256], index: 0, kind: input, shape index: {}]
  %s1 = inlined_call_operand.vmem [shape: f32[8,72], index: 1, kind: input, shape index: {}]
  %s2 = inlined_call_operand.vmem [shape: f32[8,1], index: 2, kind: input, shape index: {}]
  %s3 = inlined_call_operand.vmem [shape: f32[8,256], index: 3, kind: output, shape index: {}]
  %s4 = sld [smem:[#allocation0]]
  $region22: #{resnet_block_forward.1} parent=0
    _
  %s6 = ssub.s32 1, %s4
  %s7 = scalar_select 0, %s6, %s4
  // Predicated region
  $region2: #{resnet_block_forward.1} parent=0 // pred_check
    _
  $region3: #{resnet_block_forward.1} parent=0 // pred_check_branch
    %9 = sbr.rel (0) target = $region5
  $region4: #{resnet_block_forward.1} parent=0 // pred_region
    _
  $region5: #{resnet_block_forward.1} parent=0 // pred_fallthru
    _
  // Predicated region
  $region6: #{resnet_block_forward.1} parent=0 // pred_check
    _
  $region7: #{resnet_block_forward.1} parent=0 // pred_check_branch
    %11 = sbr.rel (0) target = $region9
  $region8: #{resnet_block_forward.1} parent=0 // pred_region
    _
  $region9: #{resnet_block_forward.1} parent=0 // pred_fallthru
    _
  // Predicated region
  $region10: #{resnet_block_forward.1} parent=0 // pred_check
    _
  $region11: #{resnet_block_forward.1} parent=0 // pred_check_branch
    %13 = sbr.rel (0) target = $region13
  $region12: #{resnet_block_forward.1} parent=0 // pred_region
    _
  $region13: #{resnet_block_forward.1} parent=0 // pred_fallthru
    _
  %v14 = vld [vmem:[%s0] sm:$0xff]
  %v15 = vld [vmem:[%s0 + $0x8] sm:$0xff]
  %v16 = vmul.f32 %v14, 0.2
  %v17 = vmul.f32 %v15, 0.2
  %v18 = vmax.f32 %v14, %v16
  %v19 = vmax.f32 %v15, %v17
  %v20 = vlaneseq
  %v21 = vand.u32 %v20, 127
  %v22 = vadd.s32 %v21, 128
  %vm23 = vcmp.lt.s32.totalorder %v21, 0
  %v24 = vsub.s32 0, %v21
  %v25 = vsel %vm23, %v24, %v21
  %v26 = vshrl.u32 %v25, 4
  %v27 = vand.u32 %v25, 15
  %v28 = vsub.s32 0, %v27
  %v29 = vsel %vm23, %v28, %v27
  %vm30 = vcmp.lt.s32.totalorder %v22, 0
  %v31 = vsub.s32 0, %v22
  %v32 = vsel %vm30, %v31, %v22
  %v33 = vshrl.u32 %v32, 4
  %v34 = vand.u32 %v32, 15
  %v35 = vsub.s32 0, %v34
  %v36 = vsel %vm30, %v35, %v34
  %vm37 = vcmp.ne.s32.totalorder %v29, 0
  %vm38 = vcmp.ne.s32.totalorder %v36, 0
  %vm39 = vcmp.lt.s32.totalorder %v29, 0
  %vm40 = vcmp.lt.s32.totalorder %v36, 0
  %vm41 = vmand %vm39, %vm37
  %vm42 = vmand %vm40, %vm38
  %v43 = vadd.s32 %v29, 16
  %v44 = vadd.s32 %v36, 16
  %v45 = vsel %vm41, %v43, %v29
  %v46 = vsel %vm42, %v44, %v36
  %vm47 = vcmp.ne.s32.totalorder %v45, 0
  %vm48 = vcmp.ne.s32.totalorder %v46, 0
  %vm49 = vcmp.ne.s32.totalorder %v45, 15
  %vm50 = vcmp.ne.s32.totalorder %v46, 15
  %53 = vrot.lane.b32.xlu0 %v18, 17
  %v54 = vpop.permute.xlu0 %53
  %55 = vrot.lane.b32.xlu0 %v19, 17
  %v56 = vpop.permute.xlu0 %55
  %vm57 = vcmask 138240
  %v58 = vsel %vm57, %v54, %v56
  %v61 = vsel %vm57, 0.0, %v54
  %v62 = vsel %vm47, 1, 0
  %v63 = vsel %vm48, 1, 0
  %vm64 = vcmp.eq.s32.totalorder %v62, 1
  %vm65 = vcmp.eq.s32.totalorder %v63, 1
  %v66 = vsel %vm64, %v61, 0.0
  %v67 = vsel %vm65, %v58, 0.0
  %68 = vst [vmem:[#allocation2] sm:$0xff] %v66
  %69 = vst [vmem:[#allocation2 + $0x8] sm:$0xff] %v67
  %70 = vrot.lane.b32.xlu0 %v18, 16
  %v71 = vpop.permute.xlu0 %70
  %72 = vrot.lane.b32.xlu0 %v19, 16
  %v73 = vpop.permute.xlu0 %72
  %vm74 = vcmask 130048
  %v75 = vsel %vm74, %v71, %v73
  %v78 = vsel %vm74, 0.0, %v71
  %79 = vst [vmem:[#allocation2 + $0x10] sm:$0xff] %v78
  %80 = vst [vmem:[#allocation2 + $0x18] sm:$0xff] %v75
  %81 = vrot.lane.b32.xlu0 %v18, 15
  %v82 = vpop.permute.xlu0 %81
  %83 = vrot.lane.b32.xlu0 %v19, 15
  %v84 = vpop.permute.xlu0 %83
  %vm85 = vcmask 121856
  %v86 = vsel %vm85, %v82, %v84
  %v89 = vsel %vm85, 0.0, %v82
  %v90 = vsel %vm49, 1, 0
  %v91 = vsel %vm50, 1, 0
  %vm92 = vcmp.eq.s32.totalorder %v90, 1
  %vm93 = vcmp.eq.s32.totalorder %v91, 1
  %v94 = vsel %vm92, %v89, 0.0
  %v95 = vsel %vm93, %v86, 0.0
  %96 = vst [vmem:[#allocation2 + $0x20] sm:$0xff] %v94
  %97 = vst [vmem:[#allocation2 + $0x28] sm:$0xff] %v95
  %98 = vrot.lane.b32.xlu0 %v18, 1
  %v99 = vpop.permute.xlu0 %98
  %100 = vrot.lane.b32.xlu0 %v19, 1
  %v101 = vpop.permute.xlu0 %100
  %vm102 = vcmask 7168
  %v103 = vsel %vm102, %v99, %v101
  %v106 = vsel %vm102, 0.0, %v99
  %v107 = vsel %vm64, %v106, 0.0
  %v108 = vsel %vm65, %v103, 0.0
  %109 = vst [vmem:[#allocation2 + $0x30] sm:$0xff] %v107
  %110 = vst [vmem:[#allocation2 + $0x38] sm:$0xff] %v108
  %111 = vst [vmem:[#allocation2 + $0x40] sm:$0xff] %v18
  %112 = vst [vmem:[#allocation2 + $0x48] sm:$0xff] %v19
  %113 = vrot.lane.b32.xlu0 %v18, 127
  %v114 = vpop.permute.xlu0 %113
  %115 = vrot.lane.b32.xlu0 %v19, 127
  %v116 = vpop.permute.xlu0 %115
  %vm117 = vcmask 1039360
  %v118 = vsel %vm117, %v114, %v116
  %v121 = vsel %vm117, %v116, 0.0
  %v122 = vsel %vm92, %v118, 0.0
  %v123 = vsel %vm93, %v121, 0.0
  %124 = vst [vmem:[#allocation2 + $0x50] sm:$0xff] %v122
  %125 = vst [vmem:[#allocation2 + $0x58] sm:$0xff] %v123
  %126 = vrot.lane.b32.xlu0 %v18, 113
  %v127 = vpop.permute.xlu0 %126
  %128 = vrot.lane.b32.xlu0 %v19, 113
  %v129 = vpop.permute.xlu0 %128
  %vm130 = vcmask 924672
  %v131 = vsel %vm130, %v127, %v129
  %v134 = vsel %vm130, %v129, 0.0
  %v135 = vsel %vm64, %v131, 0.0
  %v136 = vsel %vm65, %v134, 0.0
  %137 = vst [vmem:[#allocation2 + $0x60] sm:$0xff] %v135
  %138 = vst [vmem:[#allocation2 + $0x68] sm:$0xff] %v136
  %139 = vrot.lane.b32.xlu0 %v18, 112
  %v140 = vpop.permute.xlu0 %139
  %141 = vrot.lane.b32.xlu0 %v19, 112
  %v142 = vpop.permute.xlu0 %141
  %vm143 = vcmask 916480
  %v144 = vsel %vm143, %v140, %v142
  %v147 = vsel %vm143, %v142, 0.0
  %148 = vst [vmem:[#allocation2 + $0x70] sm:$0xff] %v144
  %149 = vst [vmem:[#allocation2 + $0x78] sm:$0xff] %v147
  %150 = vrot.lane.b32.xlu0 %v18, 111
  %v151 = vpop.permute.xlu0 %150
  %152 = vrot.lane.b32.xlu0 %v19, 111
  %v153 = vpop.permute.xlu0 %152
  %vm154 = vcmask 908288
  %v155 = vsel %vm154, %v151, %v153
  %v158 = vsel %vm154, %v153, 0.0
  %v159 = vsel %vm92, %v155, 0.0
  %v160 = vsel %vm93, %v158, 0.0
  %161 = vst [vmem:[#allocation2 + $0x80] sm:$0xff] %v159
  %162 = vst [vmem:[#allocation2 + $0x88] sm:$0xff] %v160
  %v163 = vld [vmem:[%s1] sm:$0xff]
  %v164 = vld [vmem:[#allocation2] sm:$0xff]
  %v165 = vld [vmem:[#allocation2 + $0x8] sm:$0xff]
  %v166 = vld [vmem:[#allocation2 + $0x10] sm:$0xff]
  %v167 = vld [vmem:[#allocation2 + $0x18] sm:$0xff]
  %v168 = vld [vmem:[#allocation2 + $0x20] sm:$0xff]
  %v169 = vld [vmem:[#allocation2 + $0x28] sm:$0xff]
  %v170 = vld [vmem:[#allocation2 + $0x30] sm:$0xff]
  %v171 = vld [vmem:[#allocation2 + $0x38] sm:$0xff]
  %v172 = vld [vmem:[#allocation2 + $0x40] sm:$0xff]
  %v173 = vld [vmem:[#allocation2 + $0x48] sm:$0xff]
  %v174 = vld [vmem:[#allocation2 + $0x50] sm:$0xff]
  %v175 = vld [vmem:[#allocation2 + $0x58] sm:$0xff]
  %v176 = vld [vmem:[#allocation2 + $0x60] sm:$0xff]
  %v177 = vld [vmem:[#allocation2 + $0x68] sm:$0xff]
  %v178 = vld [vmem:[#allocation2 + $0x70] sm:$0xff]
  %v179 = vld [vmem:[#allocation2 + $0x78] sm:$0xff]
  %v180 = vld [vmem:[#allocation2 + $0x80] sm:$0xff]
  %v181 = vld [vmem:[#allocation2 + $0x88] sm:$0xff]
  %vm182 = vcmask 588800
  %v184 = vsel %vm182, %v163, 0
  %186 = vmatprep.subr.mxu0 %v165
  %187 = vmatpush1.msra.mxu0 %v164
  %188 = vmatprep.subr.mxu0 %v167
  %189 = vmatpush1.msra.mxu0 %v166
  %190 = vmatprep.subr.mxu0 %v169
  %191 = vmatpush1.msra.mxu0 %v168
  %192 = vmatprep.subr.mxu0 %v171
  %193 = vmatpush1.msra.mxu0 %v170
  %194 = vmatprep.subr.mxu0 %v173
  %195 = vmatpush1.msra.mxu0 %v172
  %196 = vmatprep.subr.mxu0 %v175
  %197 = vmatpush1.msra.mxu0 %v174
  %198 = vmatprep.subr.mxu0 %v177
  %199 = vmatpush1.msra.mxu0 %v176
  %200 = vmatprep.subr.mxu0 %v179
  %201 = vmatpush1.msra.mxu0 %v178
  %202 = vmatprep.subr.mxu0 %v181
  %203 = vmatpush1.msra.mxu0 %v180
  %204 = vmatprep.subr.mxu0 0.0
  %205 = vmatpush1.msra.mxu0 0.0
  %206 = vmatprep.subr.mxu0 0.0
  %207 = vmatpush1.msra.mxu0 0.0
  %208 = vmatprep.subr.mxu0 0.0
  %209 = vmatpush1.msra.mxu0 0.0
  %210 = vmatprep.subr.mxu0 0.0
  %211 = vmatpush1.msra.mxu0 0.0
  %212 = vmatprep.subr.mxu0 0.0
  %213 = vmatpush1.msra.mxu0 0.0
  %214 = vmatprep.subr.mxu0 0.0
  %215 = vmatpush1.msra.mxu0 0.0
  %216 = vmatprep.subr.mxu0 0.0
  %217 = vmatpush1.msra.mxu0 0.0
  %218 = vmatprep.subr.mxu0 0.0
  %219 = vmatpush1.msra.mxu0 0.0
  %220 = vmatprep.subr.mxu0 0.0
  %221 = vmatpush1.msra.mxu0 0.0
  %222 = vmatprep.subr.mxu0 0.0
  %223 = vmatpush1.msra.mxu0 0.0
  %224 = vmatprep.subr.mxu0 0.0
  %225 = vmatpush1.msra.mxu0 0.0
  %226 = vmatprep.subr.mxu0 0.0
  %227 = vmatpush1.msra.mxu0 0.0
  %228 = vmatprep.subr.mxu0 0.0
  %229 = vmatpush1.msra.mxu0 0.0
  %230 = vmatprep.subr.mxu0 0.0
  %231 = vmatpush1.msra.mxu0 0.0
  %232 = vmatprep.subr.mxu0 0.0
  %233 = vmatpush1.msra.mxu0 0.0
  %234 = vmatprep.subr.mxu0 0.0
  %235 = vmatpush1.msra.mxu0 0.0
  %236 = vmatprep.subr.mxu0 0.0
  %237 = vmatpush1.msra.mxu0 0.0
  %238 = vmatprep.subr.mxu0 0.0
  %239 = vmatpush1.msra.mxu0 0.0
  %240 = vmatprep.subr.mxu0 0.0
  %241 = vmatpush1.msra.mxu0 0.0
  %242 = vmatprep.subr.mxu0 0.0
  %243 = vmatpush1.msra.mxu0 0.0
  %244 = vmatprep.subr.mxu0 0.0
  %245 = vmatpush1.msra.mxu0 0.0
  %246 = vmatprep.subr.mxu0 0.0
  %247 = vmatpush1.msra.mxu0 0.0
  %248 = vmatprep.subr.mxu0 0.0
  %249 = vmatpush1.msra.mxu0 0.0
  %250 = vmatprep.mubr.f32.mxu0 0.0
  %251 = vmatmul.mubr.f32.gmra.mrb[0].mxu0 %v184
  %v252 = vpop.f32.mrb[0].mxu0
  %v253 = vadd.f32 0.0, %v252
  %v254 = vpop.f32.mrb[0].mxu0
  %v255 = vadd.f32 0.0, %v254
  %256 = vdwg.mxu0
  %v257 = vadd.f32 %v14, %v253
  %v258 = vadd.f32 %v15, %v255
  %v259 = vld [vmem:[%s2] sm:$0xff]
  %261 = vset.pattern.permute.xlu0 0
  %262 = vperm.xlu0 %261, %v259
  %v263 = vpop.permute.xlu0 %262
  %v265 = vadd.f32 %v257, %v263
  %v266 = vadd.f32 %v258, %v263
  %267 = vst [vmem:[%s3] sm:$0xff] %v265
  %268 = vst [vmem:[%s3 + $0x8] sm:$0xff] %v266
  // Predicated region
  $region14: #{resnet_block_forward.1} parent=0 // pred_check
    _
  $region15: #{resnet_block_forward.1} parent=0 // pred_check_branch
    %270 = sbr.rel (0) target = $region17
  $region16: #{resnet_block_forward.1} parent=0 // pred_region
    _
  $region17: #{resnet_block_forward.1} parent=0 // pred_fallthru
    _
  // Predicated region
  $region18: #{resnet_block_forward.1} parent=0 // pred_check
    _
  $region19: #{resnet_block_forward.1} parent=0 // pred_check_branch
    %272 = sbr.rel (0) target = $region21
  $region20: #{resnet_block_forward.1} parent=0 // pred_region
    _
  $region21: #{resnet_block_forward.1} parent=0 // pred_fallthru
    _

</llo_original>
